<compile_context>
chip_gen: v6e
topology: v6e:2x2x1
jax: 0.10.0
libtpu: 0.0.40
codegen_flags: <defaults>
</compile_context>

<pallas_src>
import functools

import jax
import jax.numpy as jnp
from jax.experimental import pallas as pl
from jax.experimental.pallas import tpu as pltpu


_LANE = 128               # hidden/output feature dims padded to multiples of this
_SUBLANE = 8              # batch tiles rounded to multiples of this
_GRIDLESS_MAX_ROWS = 1024 # up to this many rows: single VMEM-resident block, no grid
_PREFERRED_TILE = 1024    # target rows per grid step for huge batches


def _round_up(n, m):
    return ((n + m - 1) // m) * m


def _fused_mlp_kernel(x_ref, w0_ref, w_ref, b_ref, o_ref, *, num_layers):
    """Whole MLP in one kernel.

    x_ref:  (Bblk, S)      f32   un-padded input features
    w0_ref: (S, D)         bf16  first-layer weight (out dim zero-padded to D)
    w_ref:  (L-1, D, D)    bf16  remaining weights (zero-padded square slabs)
    b_ref:  (L, 1, D)      f32   biases (zero-padded)
    o_ref:  (Bblk, D)      f32   lane-dense output (valid Q-values in [:, :action_size])
    """
    # TODO(synk): config['ACTIVATION_FUNCTION'] is an arbitrary callable in the PyTorch
    # module; this kernel hardcodes ReLU (swap jnp.maximum in the epilogue for others).
    h = jnp.dot(x_ref[...].astype(jnp.bfloat16), w0_ref[...],
                preferred_element_type=jnp.float32) + b_ref[0]
    if num_layers > 1:
        h = jnp.maximum(h, 0.0)
    for li in range(1, num_layers):                  # unrolled at trace time
        h = jnp.dot(h.astype(jnp.bfloat16), w_ref[li - 1],
                    preferred_element_type=jnp.float32) + b_ref[li]
        if li < num_layers - 1:
            h = jnp.maximum(h, 0.0)
    o_ref[...] = h.astype(o_ref.dtype)


def init_qnetwork_params(key, state_size, hidden_layers, action_size):
    """Deterministic init mirroring the nn.Linear shapes in QNetwork.__init__.
    Weights are stored (in_features, out_features) (transpose of PyTorch) so
    y = x @ W + b gives identical math."""
    dims = [state_size] + list(hidden_layers) + [action_size]
    params = []
    for i in range(len(dims) - 1):
        key, kw, kb = jax.random.split(key, 3)
        bound = 1.0 / jnp.sqrt(jnp.float32(dims[i]))   # PyTorch default U(-1/sqrt(fan_in), +)
        w = jax.random.uniform(kw, (dims[i], dims[i + 1]), jnp.float32, -bound, bound)
        b = jax.random.uniform(kb, (dims[i + 1],), jnp.float32, -bound, bound)
        params.append((w, b))
    return params


def pack_qnetwork_params(params):
    """Pack params once, outside the hot path.

    First-layer weight keeps its true input dim (no state padding); all hidden /
    output feature dims are zero-padded to a common lane-dense D (multiple of 128).
    Zero padding is mathematically inert (zero cols/rows, zero bias, ReLU(0)=0).
    Weights are bf16 (MXU fast path); biases stay f32.
    """
    # TODO(synk): for very heterogeneous widths (e.g. hidden 512 next to hidden 32),
    # ragged per-layer slabs would avoid max-dim^2 padding; fine for DQN-sized nets.
    feat_dims = [w.shape[1] for (w, _) in params]          # hidden widths + action_size
    d = _round_up(max(feat_dims), _LANE)

    w0_raw, b0_raw = params[0]
    first_out = w0_raw.shape[1]
    w0 = jnp.pad(w0_raw, ((0, 0), (0, d - first_out))).astype(jnp.bfloat16)

    ws, bs = [], [jnp.pad(b0_raw, (0, d - first_out)).reshape(1, d)]
    for (w, b) in params[1:]:
        fin, fout = w.shape
        ws.append(jnp.pad(w, ((0, d - fin), (0, d - fout))).astype(jnp.bfloat16))
        bs.append(jnp.pad(b, (0, d - fout)).reshape(1, d))
    w_rest = jnp.stack(ws)
    b_all = jnp.stack(bs).astype(jnp.float32)
    return w0, w_rest, b_all


def _fused_call(x, w0, w_rest, b_all):
    batch, s = x.shape
    d = w0.shape[-1]
    num_layers = w_rest.shape[0] + 1
    kernel = functools.partial(_fused_mlp_kernel, num_layers=num_layers)

    if batch <= _GRIDLESS_MAX_ROWS:
        # Gridless: every array is one VMEM-resident block (full-array blocks are
        # always layout-legal, even for odd row counts / the 16-wide feature dim),
        # so there is no padding, no pipeline machinery and no HBM round trips for
        # intermediate activations.  VMEM use is well under 1 MiB.
        return pl.pallas_call(
            kernel,
            out_shape=jax.ShapeDtypeStruct((batch, d), jnp.float32),
            in_specs=[
                pl.BlockSpec(memory_space=pltpu.MemorySpace.VMEM),
                pl.BlockSpec(memory_space=pltpu.MemorySpace.VMEM),
                pl.BlockSpec(memory_space=pltpu.MemorySpace.VMEM),
                pl.BlockSpec(memory_space=pltpu.MemorySpace.VMEM),
            ],
            out_specs=pl.BlockSpec(memory_space=pltpu.MemorySpace.VMEM),
        )(x, w0, w_rest, b_all)

    # Huge batches: tile the batch over a parallel grid axis.  >= 2 blocks so v7x's
    # two TensorCores both get work; ~1024-row tiles amortize per-grid-step overhead;
    # the tile is derived from the actual batch so padding waste is < _SUBLANE rows
    # per block.  Weight/bias slabs keep a constant block index -> resident in VMEM.
    n_blocks = max(2, pl.cdiv(batch, _PREFERRED_TILE))
    tile = _round_up(pl.cdiv(batch, n_blocks), _SUBLANE)
    b_pad = n_blocks * tile
    x_pad = jnp.pad(x, ((0, b_pad - batch), (0, 0))) if b_pad != batch else x
    return pl.pallas_call(
        kernel,
        out_shape=jax.ShapeDtypeStruct((b_pad, d), jnp.float32),
        grid=(n_blocks,),
        in_specs=[
            pl.BlockSpec((tile, s), lambda i: (i, 0)),
            pl.BlockSpec(w0.shape, lambda i: (0, 0)),
            pl.BlockSpec(w_rest.shape, lambda i: (0, 0, 0)),
            pl.BlockSpec(b_all.shape, lambda i: (0, 0, 0)),
        ],
        out_specs=pl.BlockSpec((tile, d), lambda i: (i, 0)),
        compiler_params=pltpu.CompilerParams(
            dimension_semantics=("parallel",)),
    )(x_pad, w0, w_rest, b_all)


@functools.partial(jax.jit, static_argnames=("action_size",))
def qnetwork_forward(packed_params, state, action_size):
    """Forward pass: activation after every layer except the last (ReLU)."""
    w0, w_rest, b_all = packed_params
    batch = state.shape[0]
    x = state.astype(jnp.float32)
    out_pad = _fused_call(x, w0, w_rest, b_all)
    return out_pad[:batch, :action_size]


if __name__ == "__main__":
    # Synthetic config: STATE_SIZE=16, LAYERS=[32, 32], ACTION_SIZE=4, activation=ReLU
    STATE_SIZE = 16
    LAYERS = [32, 32]
    ACTION_SIZE = 4

    key = jax.random.PRNGKey(0)
    key, k_a, k_b, k_c = jax.random.split(key, 4)
    params = init_qnetwork_params(key, STATE_SIZE, LAYERS, ACTION_SIZE)
    packed = pack_qnetwork_params(params)

    def reference(x):
        """Pure-JAX reference with the same bf16 weight rounding as the kernel."""
        h = x.astype(jnp.float32)
        for i, (w, b) in enumerate(params):
            wq = w.astype(jnp.bfloat16).astype(jnp.float32)
            hq = h.astype(jnp.bfloat16).astype(jnp.float32)
            h = jnp.dot(hq, wq, precision=jax.lax.Precision.HIGHEST) + b
            if i < len(params) - 1:
                h = jnp.maximum(h, 0.0)
        return h

    def check(state):
        out = qnetwork_forward(packed, state, ACTION_SIZE)
        jax.block_until_ready(out)
        assert out.shape == (state.shape[0], ACTION_SIZE)
        ref = reference(state)
        assert jnp.allclose(out, ref, atol=1e-2, rtol=1e-2), (
            float(jnp.max(jnp.abs(out - ref))))

    # Small "action-selection" batch -> gridless fused kernel (no padding at all).
    check(jax.random.normal(k_a, (8, STATE_SIZE), jnp.float32))
    # Typical replay batch, odd row count -> still gridless, full-array block.
    check(jax.random.normal(k_b, (300, STATE_SIZE), jnp.float32))
    # Very large sweep batch -> batch-tiled parallel grid (3 blocks of 840 rows).
    check(jax.random.normal(k_c, (2500, STATE_SIZE), jnp.float32))

    print("KERNEL_OK")
</pallas_src>

<mosaic_0001>
module attributes {stable_mosaic.version = 11 : i64} {
  func.func @_fused_mlp_kernel(%arg0: memref<8x16xf32, #tpu.memory_space<vmem>>, %arg1: memref<16x128xbf16, #tpu.memory_space<vmem>>, %arg2: memref<2x128x128xbf16, #tpu.memory_space<vmem>>, %arg3: memref<3x1x128xf32, #tpu.memory_space<vmem>>, %arg4: memref<8x128xf32, #tpu.memory_space<vmem>>) attributes {dimension_semantics = [], scalar_prefetch = 0 : i64, scratch_operands = 0 : i64, tpu.core_type = #tpu.core_type<tc>} {
    %c0 = arith.constant 0 : index
    %c0_0 = arith.constant 0 : index
    %0 = vector.load %arg0[%c0, %c0_0] : memref<8x16xf32, #tpu.memory_space<vmem>>, vector<8x16xf32>
    %1 = arith.truncf %0 : vector<8x16xf32> to vector<8x16xbf16>
    %c0_1 = arith.constant 0 : index
    %c0_2 = arith.constant 0 : index
    %2 = vector.load %arg1[%c0_1, %c0_2] : memref<16x128xbf16, #tpu.memory_space<vmem>>, vector<16x128xbf16>
    %cst = arith.constant dense<0.000000e+00> : vector<8x128xf32>
    %3 = tpu.matmul %1, %2, %cst {dimension_numbers = #tpu.dot_dimension_numbers<[1], [0], [0], [1], [0, 0, 1, 1], [], []>} : vector<8x16xbf16>, vector<16x128xbf16>, vector<8x128xf32> -> vector<8x128xf32>
    %c0_3 = arith.constant 0 : index
    %c0_4 = arith.constant 0 : index
    %c0_5 = arith.constant 0 : index
    %4 = vector.load %arg3[%c0_3, %c0_4, %c0_5] : memref<3x1x128xf32, #tpu.memory_space<vmem>>, vector<1x1x128xf32>
    %5 = vector.shape_cast %4 : vector<1x1x128xf32> to vector<1x128xf32>
    %6 = vector.broadcast %5 : vector<1x128xf32> to vector<8x128xf32>
    %7 = arith.addf %3, %6 : vector<8x128xf32>
    %cst_6 = arith.constant 0.000000e+00 : f32
    %8 = vector.broadcast %cst_6 : f32 to vector<8x128xf32>
    %9 = arith.maximumf %7, %8 : vector<8x128xf32>
    %10 = arith.truncf %9 : vector<8x128xf32> to vector<8x128xbf16>
    %c0_7 = arith.constant 0 : index
    %c0_8 = arith.constant 0 : index
    %c0_9 = arith.constant 0 : index
    %11 = vector.load %arg2[%c0_7, %c0_8, %c0_9] : memref<2x128x128xbf16, #tpu.memory_space<vmem>>, vector<1x128x128xbf16>
    %12 = vector.shape_cast %11 : vector<1x128x128xbf16> to vector<128x128xbf16>
    %cst_10 = arith.constant dense<0.000000e+00> : vector<8x128xf32>
    %13 = tpu.matmul %10, %12, %cst_10 {dimension_numbers = #tpu.dot_dimension_numbers<[1], [0], [0], [1], [0, 0, 1, 1], [], []>} : vector<8x128xbf16>, vector<128x128xbf16>, vector<8x128xf32> -> vector<8x128xf32>
    %c1 = arith.constant 1 : index
    %c0_11 = arith.constant 0 : index
    %c0_12 = arith.constant 0 : index
    %14 = vector.load %arg3[%c1, %c0_11, %c0_12] : memref<3x1x128xf32, #tpu.memory_space<vmem>>, vector<1x1x128xf32>
    %15 = vector.shape_cast %14 : vector<1x1x128xf32> to vector<1x128xf32>
    %16 = vector.broadcast %15 : vector<1x128xf32> to vector<8x128xf32>
    %17 = arith.addf %13, %16 : vector<8x128xf32>
    %cst_13 = arith.constant 0.000000e+00 : f32
    %18 = vector.broadcast %cst_13 : f32 to vector<8x128xf32>
    %19 = arith.maximumf %17, %18 : vector<8x128xf32>
    %20 = arith.truncf %19 : vector<8x128xf32> to vector<8x128xbf16>
    %c1_14 = arith.constant 1 : index
    %c0_15 = arith.constant 0 : index
    %c0_16 = arith.constant 0 : index
    %21 = vector.load %arg2[%c1_14, %c0_15, %c0_16] : memref<2x128x128xbf16, #tpu.memory_space<vmem>>, vector<1x128x128xbf16>
    %22 = vector.shape_cast %21 : vector<1x128x128xbf16> to vector<128x128xbf16>
    %cst_17 = arith.constant dense<0.000000e+00> : vector<8x128xf32>
    %23 = tpu.matmul %20, %22, %cst_17 {dimension_numbers = #tpu.dot_dimension_numbers<[1], [0], [0], [1], [0, 0, 1, 1], [], []>} : vector<8x128xbf16>, vector<128x128xbf16>, vector<8x128xf32> -> vector<8x128xf32>
    %c2 = arith.constant 2 : index
    %c0_18 = arith.constant 0 : index
    %c0_19 = arith.constant 0 : index
    %24 = vector.load %arg3[%c2, %c0_18, %c0_19] : memref<3x1x128xf32, #tpu.memory_space<vmem>>, vector<1x1x128xf32>
    %25 = vector.shape_cast %24 : vector<1x1x128xf32> to vector<1x128xf32>
    %26 = vector.broadcast %25 : vector<1x128xf32> to vector<8x128xf32>
    %27 = arith.addf %23, %26 : vector<8x128xf32>
    %c0_20 = arith.constant 0 : index
    %c0_21 = arith.constant 0 : index
    %28 = vector.load %arg4[%c0_20, %c0_21] : memref<8x128xf32, #tpu.memory_space<vmem>>, vector<8x128xf32>
    tpu.vector_store %arg4[%c0_20, %c0_21], %27 {strides = array<i32>} : memref<8x128xf32, #tpu.memory_space<vmem>>, vector<8x128xf32>,
    return
  }
}

</mosaic_0001>

<llo_original>
// kernel: qnetwork_forward.1
$region0: #{qnetwork_forward.1}
  #allocation0 [shape = 'u32[]', space=smem, size = 0x4, offset = 0x4, fixed_abs, tag = 'smem constant byte address 0x4 - core index']
  #allocation1 [shape = 'u32[144,128]{1,0:T(1,128)}', space=vmem, size = 0x12000, scoped, tag = 'internal scratch']
  %s0 = inlined_call_operand.hbm [shape: f32[8,16], index: 0, kind: input, shape index: {}]
  %s1 = inlined_call_operand.hbm [shape: bf16[16,128], index: 1, kind: input, shape index: {}]
  %s2 = inlined_call_operand.hbm [shape: bf16[2,128,128], index: 2, kind: input, shape index: {}]
  %s3 = inlined_call_operand.vmem [shape: f32[3,1,128], index: 3, kind: input, shape index: {}]
  %s4 = inlined_call_operand.vmem [shape: f32[8,128], index: 4, kind: output, shape index: {}]
  %s5 = sld [smem:[#allocation0]]
  $region38: #{qnetwork_forward.1} parent=0
    _
  %s7 = ssub.s32 1, %s5
  %s8 = scalar_select 0, %s7, %s5
  $region1: #{qnetwork_forward.1} parent=0
    #allocation2 [shape = 'u8[4096]{0}', space=vmem, size = 0x1000, scoped, tag = 'input window, operand 0, single buffered']
    #allocation3 [shape = 's32[1]{0}', space=sflag, size = 0x4, scoped, tag = 'scoped memory for qnetwork_forward.1']
    #allocation4 [shape = 'u8[4096]{0}', space=vmem, size = 0x1000, scoped, tag = 'input window, operand 1, single buffered']
    #allocation5 [shape = 's32[1]{0}', space=sflag, size = 0x4, scoped, tag = 'scoped memory for qnetwork_forward.1']
    #allocation6 [shape = 'u8[65536]{0}', space=vmem, size = 0x10000, scoped, tag = 'input window, operand 2, single buffered']
    %9 = vsyncpa [#allocation3], 0
    %10 = vsyncpa [#allocation5], 0
    // Predicated region
    $region2: #{qnetwork_forward.1} parent=1 // pred_check
      _
    $region3: #{qnetwork_forward.1} parent=1 // pred_check_branch
      %12 = sbr.rel (0) target = $region5
    $region4: #{qnetwork_forward.1} parent=1 // pred_region
      %s14 = ssub.s32 128, 128
      %15 = vsyncadd [#allocation3], %s14
      %s17 = sshll.u32 [#allocation2], 4
      %s18 = int_to_ptr.vmem [resolvable:$true] %s17
      %20 = dma.hbm_to_vmem [thread:$0]  %s0, 128, %s18, [#allocation3]
    $region5: #{qnetwork_forward.1} parent=1 // pred_fallthru
      _
    // Predicated region
    $region6: #{qnetwork_forward.1} parent=1 // pred_check
      _
    $region7: #{qnetwork_forward.1} parent=1 // pred_check_branch
      %22 = sbr.rel (0) target = $region9
    $region8: #{qnetwork_forward.1} parent=1 // pred_region
      %s24 = ssub.s32 128, 128
      %25 = vsyncadd [#allocation5], %s24
      %s26 = sshll.u32 [#allocation4], 4
      %s27 = int_to_ptr.vmem [resolvable:$true] %s26
      %32 = dma.hbm_to_vmem [thread:$0]  %s1, 128, %s27, [#allocation5], 64, 64, 4
    $region9: #{qnetwork_forward.1} parent=1 // pred_fallthru
      _
    // Predicated region
    $region10: #{qnetwork_forward.1} parent=1 // pred_check
      _
    $region11: #{qnetwork_forward.1} parent=1 // pred_check_branch
      %34 = sbr.rel (0) target = $region13
    $region12: #{qnetwork_forward.1} parent=1 // pred_region
      %s36 = ssub.s32 2048, 2048
      %37 = vsyncadd [#allocation5], %s36
      %s38 = sshll.u32 [#allocation6], 4
      %s39 = int_to_ptr.vmem [resolvable:$true] %s38
      %44 = dma.hbm_to_vmem [thread:$0]  %s2, 2048, %s39, [#allocation5], 64, 64, 4
    $region13: #{qnetwork_forward.1} parent=1 // pred_fallthru
      _
    // Predicated region
    $region14: #{qnetwork_forward.1} parent=1 // pred_check
      _
    $region15: #{qnetwork_forward.1} parent=1 // pred_check_branch
      %46 = sbr.rel (0) target = $region17
    $region16: #{qnetwork_forward.1} parent=1 // pred_region
      _
    $region17: #{qnetwork_forward.1} parent=1 // pred_fallthru
      _
    // Predicated region
    $region18: #{qnetwork_forward.1} parent=1 // pred_check
      _
    $region19: #{qnetwork_forward.1} parent=1 // pred_check_branch
      %48 = sbr.rel (0) target = $region21
    $region20: #{qnetwork_forward.1} parent=1 // pred_region
      %49 = dma.done [#allocation3], 128
    $region21: #{qnetwork_forward.1} parent=1 // pred_fallthru
      _
    // Predicated region
    $region22: #{qnetwork_forward.1} parent=1 // pred_check
      _
    $region23: #{qnetwork_forward.1} parent=1 // pred_check_branch
      %51 = sbr.rel (0) target = $region25
    $region24: #{qnetwork_forward.1} parent=1 // pred_region
      %52 = dma.done [#allocation5], 128
    $region25: #{qnetwork_forward.1} parent=1 // pred_fallthru
      _
    // Predicated region
    $region26: #{qnetwork_forward.1} parent=1 // pred_check
      _
    $region27: #{qnetwork_forward.1} parent=1 // pred_check_branch
      %54 = sbr.rel (0) target = $region29
    $region28: #{qnetwork_forward.1} parent=1 // pred_region
      %55 = dma.done [#allocation5], 2048
    $region29: #{qnetwork_forward.1} parent=1 // pred_fallthru
      _
    %v57 = vld [vmem:[#allocation2] sm:$0xff]
    %v58 = vpack.c.bf16 %v57, %v57
    %v59 = vld [vmem:[#allocation4] sm:$0xf]
    %v60 = vld [vmem:[#allocation4 + $0x4] sm:$0xf]
    %v61 = vld [vmem:[%s3] sm:$0x1]
    %v63 = vlaneseq
    %v64 = vshrl.u32 %v63, 7
    %v65 = vsub.s32 0, %v64
    %v66 = vrot.slane %v61, %v65
    %v70 = vunpack.c.l.b16 %v59
    %v71 = vunpack.c.l.b16 %v60
    %v72 = vpack.c.b16 %v71, %v70
    %vm74 = vcmask 130048
    %v76 = vsel %vm74, %v58, 0
    %78 = vmatprep.subr.bf16.mxu0 0
    %79 = vmatpush1.bf16.msra.mxu0 0
    %80 = vmatprep.subr.bf16.mxu0 0
    %81 = vmatpush1.bf16.msra.mxu0 0
    %82 = vmatprep.subr.bf16.mxu0 0
    %83 = vmatpush1.bf16.msra.mxu0 0
    %84 = vmatprep.subr.bf16.mxu0 0
    %85 = vmatpush1.bf16.msra.mxu0 0
    %86 = vmatprep.subr.bf16.mxu0 0
    %87 = vmatpush1.bf16.msra.mxu0 0
    %88 = vmatprep.subr.bf16.mxu0 0
    %89 = vmatpush1.bf16.msra.mxu0 0
    %90 = vmatprep.subr.bf16.mxu0 0
    %91 = vmatpush1.bf16.msra.mxu0 0
    %92 = vmatprep.subr.bf16.mxu0 0
    %93 = vmatpush1.bf16.msra.mxu0 %v72
    %94 = vmatprep.subr.bf16.mxu0 0
    %95 = vmatpush2.bf16.msra.mxu0 0
    %96 = vmatprep.subr.bf16.mxu0 0
    %97 = vmatpush2.bf16.msra.mxu0 0
    %98 = vmatprep.subr.bf16.mxu0 0
    %99 = vmatpush2.bf16.msra.mxu0 0
    %100 = vmatprep.subr.bf16.mxu0 0
    %101 = vmatpush2.bf16.msra.mxu0 0
    %102 = vmatprep.subr.bf16.mxu0 0
    %103 = vmatpush2.bf16.msra.mxu0 0
    %104 = vmatprep.subr.bf16.mxu0 0
    %105 = vmatpush2.bf16.msra.mxu0 0
    %106 = vmatprep.subr.bf16.mxu0 0
    %107 = vmatpush2.bf16.msra.mxu0 0
    %108 = vmatprep.subr.bf16.mxu0 0
    %109 = vmatpush2.bf16.msra.mxu0 0
    %110 = vmatprep.mubr.bf16.mxu0 0
    %111 = vmatmul.mubr.bf16.gmra.mxu0 %v76
    %v112 = vpop.f32.mrf.mxu0
    %v113 = vadd.f32 %v66, %v112
    %v114 = vpop.f32.mrf.mxu0
    %v115 = vpop.f32.mrf.mxu0
    %v116 = vpop.f32.mrf.mxu0
    %117 = vdwg.mxu0
    %v118 = vmax.f32 %v113, 0.0
    %v119 = vpack.c.bf16 %v118, %v118
    %v120 = vld [vmem:[#allocation6] sm:$0xf]
    %v121 = vld [vmem:[#allocation6 + $0x4] sm:$0xf]
    %v122 = vld [vmem:[#allocation6 + $0x8] sm:$0xf]
    %v123 = vld [vmem:[#allocation6 + $0xc] sm:$0xf]
    %v124 = vld [vmem:[#allocation6 + $0x10] sm:$0xf]
    %v125 = vld [vmem:[#allocation6 + $0x14] sm:$0xf]
    %v126 = vld [vmem:[#allocation6 + $0x18] sm:$0xf]
    %v127 = vld [vmem:[#allocation6 + $0x1c] sm:$0xf]
    %v128 = vld [vmem:[#allocation6 + $0x20] sm:$0xf]
    %v129 = vld [vmem:[#allocation6 + $0x24] sm:$0xf]
    %v130 = vld [vmem:[#allocation6 + $0x28] sm:$0xf]
    %v131 = vld [vmem:[#allocation6 + $0x2c] sm:$0xf]
    %v132 = vld [vmem:[#allocation6 + $0x30] sm:$0xf]
    %v133 = vld [vmem:[#allocation6 + $0x34] sm:$0xf]
    %v134 = vld [vmem:[#allocation6 + $0x38] sm:$0xf]
    %v135 = vld [vmem:[#allocation6 + $0x3c] sm:$0xf]
    %s136 = scalar_lea.vmem %s3, 1
    %v137 = vld [vmem:[%s136] sm:$0x1]
    %v139 = vlaneseq
    %v140 = vshrl.u32 %v139, 7
    %v141 = vsub.s32 0, %v140
    %v142 = vrot.slane %v137, %v141
    %v160 = vunpack.c.l.b16 %v120
    %v161 = vunpack.c.l.b16 %v121
    %v162 = vunpack.c.l.b16 %v122
    %v163 = vunpack.c.l.b16 %v123
    %v164 = vunpack.c.l.b16 %v124
    %v165 = vunpack.c.l.b16 %v125
    %v166 = vunpack.c.l.b16 %v126
    %v167 = vunpack.c.l.b16 %v127
    %v168 = vunpack.c.l.b16 %v128
    %v169 = vunpack.c.l.b16 %v129
    %v170 = vunpack.c.l.b16 %v130
    %v171 = vunpack.c.l.b16 %v131
    %v172 = vunpack.c.l.b16 %v132
    %v173 = vunpack.c.l.b16 %v133
    %v174 = vunpack.c.l.b16 %v134
    %v175 = vunpack.c.l.b16 %v135
    %v176 = vpack.c.b16 %v161, %v160
    %v177 = vpack.c.b16 %v163, %v162
    %v178 = vpack.c.b16 %v165, %v164
    %v179 = vpack.c.b16 %v167, %v166
    %v180 = vpack.c.b16 %v169, %v168
    %v181 = vpack.c.b16 %v171, %v170
    %v182 = vpack.c.b16 %v173, %v172
    %v183 = vpack.c.b16 %v175, %v174
    %192 = vmatprep.subr.bf16.mxu0 0
    %193 = vmatpush1.bf16.msra.mxu0 %v183
    %194 = vmatprep.subr.bf16.mxu0 0
    %195 = vmatpush1.bf16.msra.mxu0 %v182
    %196 = vmatprep.subr.bf16.mxu0 0
    %197 = vmatpush1.bf16.msra.mxu0 %v181
    %198 = vmatprep.subr.bf16.mxu0 0
    %199 = vmatpush1.bf16.msra.mxu0 %v180
    %200 = vmatprep.subr.bf16.mxu0 0
    %201 = vmatpush1.bf16.msra.mxu0 %v179
    %202 = vmatprep.subr.bf16.mxu0 0
    %203 = vmatpush1.bf16.msra.mxu0 %v178
    %204 = vmatprep.subr.bf16.mxu0 0
    %205 = vmatpush1.bf16.msra.mxu0 %v177
    %206 = vmatprep.subr.bf16.mxu0 0
    %207 = vmatpush1.bf16.msra.mxu0 %v176
    %208 = vmatprep.subr.bf16.mxu0 0
    %209 = vmatpush2.bf16.msra.mxu0 0
    %210 = vmatprep.subr.bf16.mxu0 0
    %211 = vmatpush2.bf16.msra.mxu0 0
    %212 = vmatprep.subr.bf16.mxu0 0
    %213 = vmatpush2.bf16.msra.mxu0 0
    %214 = vmatprep.subr.bf16.mxu0 0
    %215 = vmatpush2.bf16.msra.mxu0 0
    %216 = vmatprep.subr.bf16.mxu0 0
    %217 = vmatpush2.bf16.msra.mxu0 0
    %218 = vmatprep.subr.bf16.mxu0 0
    %219 = vmatpush2.bf16.msra.mxu0 0
    %220 = vmatprep.subr.bf16.mxu0 0
    %221 = vmatpush2.bf16.msra.mxu0 0
    %222 = vmatprep.subr.bf16.mxu0 0
    %223 = vmatpush2.bf16.msra.mxu0 0
    %224 = vmatprep.mubr.bf16.mxu0 0
    %225 = vmatmul.mubr.bf16.gmra.mxu0 %v119
    %v226 = vpop.f32.mrf.mxu0
    %v227 = vadd.f32 %v142, %v226
    %v228 = vpop.f32.mrf.mxu0
    %v229 = vpop.f32.mrf.mxu0
    %v230 = vpop.f32.mrf.mxu0
    %231 = vdwg.mxu0
    %v232 = vmax.f32 %v227, 0.0
    %v233 = vpack.c.bf16 %v232, %v232
    %s234 = scalar_lea.vmem [#allocation6], 64
    %v235 = vld [vmem:[%s234] sm:$0xf]
    %v236 = vld [vmem:[%s234 + $0x4] sm:$0xf]
    %v237 = vld [vmem:[%s234 + $0x8] sm:$0xf]
    %v238 = vld [vmem:[%s234 + $0xc] sm:$0xf]
    %v239 = vld [vmem:[%s234 + $0x10] sm:$0xf]
    %v240 = vld [vmem:[%s234 + $0x14] sm:$0xf]
    %v241 = vld [vmem:[%s234 + $0x18] sm:$0xf]
    %v242 = vld [vmem:[%s234 + $0x1c] sm:$0xf]
    %v243 = vld [vmem:[%s234 + $0x20] sm:$0xf]
    %v244 = vld [vmem:[%s234 + $0x24] sm:$0xf]
    %v245 = vld [vmem:[%s234 + $0x28] sm:$0xf]
    %v246 = vld [vmem:[%s234 + $0x2c] sm:$0xf]
    %v247 = vld [vmem:[%s234 + $0x30] sm:$0xf]
    %v248 = vld [vmem:[%s234 + $0x34] sm:$0xf]
    %v249 = vld [vmem:[%s234 + $0x38] sm:$0xf]
    %v250 = vld [vmem:[%s234 + $0x3c] sm:$0xf]
    %s251 = scalar_lea.vmem %s3, 2
    %v252 = vld [vmem:[%s251] sm:$0x1]
    %v254 = vlaneseq
    %v255 = vshrl.u32 %v254, 7
    %v256 = vsub.s32 0, %v255
    %v257 = vrot.slane %v252, %v256
    %v275 = vunpack.c.l.b16 %v235
    %v276 = vunpack.c.l.b16 %v236
    %v277 = vunpack.c.l.b16 %v237
    %v278 = vunpack.c.l.b16 %v238
    %v279 = vunpack.c.l.b16 %v239
    %v280 = vunpack.c.l.b16 %v240
    %v281 = vunpack.c.l.b16 %v241
    %v282 = vunpack.c.l.b16 %v242
    %v283 = vunpack.c.l.b16 %v243
    %v284 = vunpack.c.l.b16 %v244
    %v285 = vunpack.c.l.b16 %v245
    %v286 = vunpack.c.l.b16 %v246
    %v287 = vunpack.c.l.b16 %v247
    %v288 = vunpack.c.l.b16 %v248
    %v289 = vunpack.c.l.b16 %v249
    %v290 = vunpack.c.l.b16 %v250
    %v291 = vpack.c.b16 %v276, %v275
    %v292 = vpack.c.b16 %v278, %v277
    %v293 = vpack.c.b16 %v280, %v279
    %v294 = vpack.c.b16 %v282, %v281
    %v295 = vpack.c.b16 %v284, %v283
    %v296 = vpack.c.b16 %v286, %v285
    %v297 = vpack.c.b16 %v288, %v287
    %v298 = vpack.c.b16 %v290, %v289
    %307 = vmatprep.subr.bf16.mxu0 0
    %308 = vmatpush1.bf16.msra.mxu0 %v298
    %309 = vmatprep.subr.bf16.mxu0 0
    %310 = vmatpush1.bf16.msra.mxu0 %v297
    %311 = vmatprep.subr.bf16.mxu0 0
    %312 = vmatpush1.bf16.msra.mxu0 %v296
    %313 = vmatprep.subr.bf16.mxu0 0
    %314 = vmatpush1.bf16.msra.mxu0 %v295
    %315 = vmatprep.subr.bf16.mxu0 0
    %316 = vmatpush1.bf16.msra.mxu0 %v294
    %317 = vmatprep.subr.bf16.mxu0 0
    %318 = vmatpush1.bf16.msra.mxu0 %v293
    %319 = vmatprep.subr.bf16.mxu0 0
    %320 = vmatpush1.bf16.msra.mxu0 %v292
    %321 = vmatprep.subr.bf16.mxu0 0
    %322 = vmatpush1.bf16.msra.mxu0 %v291
    %323 = vmatprep.subr.bf16.mxu0 0
    %324 = vmatpush2.bf16.msra.mxu0 0
    %325 = vmatprep.subr.bf16.mxu0 0
    %326 = vmatpush2.bf16.msra.mxu0 0
    %327 = vmatprep.subr.bf16.mxu0 0
    %328 = vmatpush2.bf16.msra.mxu0 0
    %329 = vmatprep.subr.bf16.mxu0 0
    %330 = vmatpush2.bf16.msra.mxu0 0
    %331 = vmatprep.subr.bf16.mxu0 0
    %332 = vmatpush2.bf16.msra.mxu0 0
    %333 = vmatprep.subr.bf16.mxu0 0
    %334 = vmatpush2.bf16.msra.mxu0 0
    %335 = vmatprep.subr.bf16.mxu0 0
    %336 = vmatpush2.bf16.msra.mxu0 0
    %337 = vmatprep.subr.bf16.mxu0 0
    %338 = vmatpush2.bf16.msra.mxu0 0
    %339 = vmatprep.mubr.bf16.mxu0 0
    %340 = vmatmul.mubr.bf16.gmra.mxu0 %v233
    %v341 = vpop.f32.mrf.mxu0
    %v342 = vadd.f32 %v257, %v341
    %v343 = vpop.f32.mrf.mxu0
    %v344 = vpop.f32.mrf.mxu0
    %v345 = vpop.f32.mrf.mxu0
    %346 = vdwg.mxu0
    %347 = vst [vmem:[%s4] sm:$0xff] %v342
    // Predicated region
    $region30: #{qnetwork_forward.1} parent=1 // pred_check
      _
    $region31: #{qnetwork_forward.1} parent=1 // pred_check_branch
      %349 = sbr.rel (0) target = $region33
    $region32: #{qnetwork_forward.1} parent=1 // pred_region
      _
    $region33: #{qnetwork_forward.1} parent=1 // pred_fallthru
      _
    // Predicated region
    $region34: #{qnetwork_forward.1} parent=1 // pred_check
      _
    $region35: #{qnetwork_forward.1} parent=1 // pred_check_branch
      %351 = sbr.rel (0) target = $region37
    $region36: #{qnetwork_forward.1} parent=1 // pred_region
      _
    $region37: #{qnetwork_forward.1} parent=1 // pred_fallthru
      _
    %352 = vsyncpa [#allocation3], 1
    %353 = vsyncpa [#allocation5], 1

</llo_original>
